<compile_context>
chip_gen: v7x
topology: tpu7x:2x2x1
jax: 0.10.0
libtpu: 0.0.40
codegen_flags: <defaults>
</compile_context>

<pallas_src>
import functools
import math

import numpy as np

import jax
import jax.numpy as jnp
from jax.experimental import pallas as pl
from jax.experimental.pallas import tpu as pltpu

DEFAULT_SR = 16000
N_MELS = 80
EPS = 1e-6


def _round_up(x: int, m: int) -> int:
    return (x + m - 1) // m * m


def _mel_filterbank_np(n_freqs: int, f_min: float, f_max: float,
                       n_mels: int, sr: int) -> np.ndarray:
    """torchaudio.functional.melscale_fbanks (mel_scale='htk', norm=None), in numpy."""
    def hz_to_mel(f):
        return 2595.0 * np.log10(1.0 + f / 700.0)

    def mel_to_hz(m):
        return 700.0 * (10.0 ** (m / 2595.0) - 1.0)

    all_freqs = np.linspace(0.0, sr / 2.0, n_freqs)
    m_pts = np.linspace(hz_to_mel(f_min), hz_to_mel(f_max), n_mels + 2)
    f_pts = mel_to_hz(m_pts)

    f_diff = f_pts[1:] - f_pts[:-1]                  # [n_mels + 1]
    slopes = f_pts[None, :] - all_freqs[:, None]     # [n_freqs, n_mels + 2]
    down = -slopes[:, :-2] / f_diff[:-1]
    up = slopes[:, 2:] / f_diff[1:]
    fb = np.maximum(0.0, np.minimum(down, up))
    return fb.astype(np.float32)                     # [n_freqs, n_mels]


@functools.lru_cache(maxsize=None)
def _padded_constants(sr: int, n_mels: int):
    """Host-side numpy constants, zero-padded to MXU-friendly (128-aligned) shapes.

    Returns (fused_basis [k_pad, 2*nf_pad], mel_fb [nf_pad, nm_pad], k_pad, nf_pad, nm_pad).
    Fused basis columns [0:nf_pad) hold the windowed cos basis, [nf_pad:2*nf_pad) the
    windowed sin basis; all pads are exact zeros so padded matmuls are exact.
    """
    n_fft = int(25 / 1000 * sr)                      # 400
    n_freqs = n_fft // 2 + 1                         # 201
    k_pad = _round_up(n_fft, 128)                    # 512
    nf_pad = _round_up(n_freqs, 128)                 # 256
    nm_pad = _round_up(n_mels, 128)                  # 128

    n = np.arange(n_fft, dtype=np.float64)
    window = 0.5 - 0.5 * np.cos(2.0 * np.pi * n / n_fft)   # periodic Hann, win_length=n_fft
    ang = 2.0 * np.pi * np.outer(n, np.arange(n_freqs, dtype=np.float64)) / n_fft
    cos_b = window[:, None] * np.cos(ang)
    sin_b = window[:, None] * np.sin(ang)

    basis = np.zeros((k_pad, 2 * nf_pad), np.float32)
    basis[:n_fft, :n_freqs] = cos_b
    basis[:n_fft, nf_pad:nf_pad + n_freqs] = sin_b

    mel_fb = np.zeros((nf_pad, nm_pad), np.float32)
    mel_fb[:n_freqs, :n_mels] = _mel_filterbank_np(n_freqs, 0.0, sr / 2.0, n_mels, sr)
    return basis, mel_fb, k_pad, nf_pad, nm_pad


def _frame_signal(padded: jnp.ndarray, n_frames: int, n_fft: int, hop: int) -> jnp.ndarray:
    """frames[b, t, c] = padded[b, t*hop + c], built from static strided slices (no gather)."""
    B, P = padded.shape
    n_pieces = -(-n_fft // hop)                      # 3 for (400, 160)
    n_rows = n_frames + n_pieces
    need = n_rows * hop
    if need > P:
        padded = jnp.pad(padded, ((0, 0), (0, need - P)))
    else:
        padded = padded[:, :need]
    chunks = padded.reshape(B, n_rows, hop)
    pieces = []
    for j in range(n_pieces):
        w = min(hop, n_fft - j * hop)
        pieces.append(chunks[:, j:j + n_frames, :w])
    return jnp.concatenate(pieces, axis=-1)          # [B, n_frames, n_fft]


def _logmel_kernel(eps, nf_pad, frames_ref, basis_ref, mel_ref, out_ref):
    """One fused lane-aligned DFT matmul -> power spectrum -> mel matmul -> log."""
    # [TM, k_pad] bf16 x [k_pad, 2*nf_pad] bf16 -> f32   (re | im, split at 128-aligned lane)
    spec = jnp.dot(frames_ref[...], basis_ref[...],
                   preferred_element_type=jnp.float32)
    re = spec[:, :nf_pad]
    im = spec[:, nf_pad:]
    power = re * re + im * im                                  # f32 [TM, nf_pad]
    # Mel projection kept in f32: ~1/8 the FLOPs of the DFT matmul, so the extra
    # MXU passes are negligible and it avoids a bf16 round-trip on the power spectrum.
    mel = jnp.dot(power, mel_ref[...],
                  preferred_element_type=jnp.float32)          # f32 [TM, nm_pad]
    out_ref[...] = jnp.log(mel + eps)


def log_mel_spec(audio: jnp.ndarray,
                 sr: int = DEFAULT_SR,
                 n_mels: int = N_MELS,
                 eps: float = EPS,
                 tile_m: int = 1024) -> jnp.ndarray:
    """audio: [batch, audio_len] -> [batch, n_frames, n_mels] float32."""
    audio = audio.astype(jnp.float32)
    B, L = audio.shape

    n_fft = int(25 / 1000 * sr)
    hop = int(10 / 1000 * sr)
    pad = n_fft // 2

    basis_np, mel_np, k_pad, nf_pad, nm_pad = _padded_constants(sr, n_mels)
    basis = jnp.asarray(basis_np).astype(jnp.bfloat16)         # [k_pad, 2*nf_pad]
    mel_fb = jnp.asarray(mel_np)                               # [nf_pad, nm_pad] f32

    # center=True, pad_mode="reflect" (torch.stft defaults inside MelSpectrogram)
    padded = jnp.pad(audio, ((0, 0), (pad, pad)), mode="reflect")
    n_frames = 1 + (padded.shape[1] - n_fft) // hop
    frames = _frame_signal(padded, n_frames, n_fft, hop)       # [B, n_frames, n_fft]

    M = B * n_frames
    tm = min(tile_m, _round_up(M, 8))
    m_pad = _round_up(M, tm)

    frames2d = frames.reshape(M, n_fft)
    frames2d = jnp.pad(frames2d, ((0, m_pad - M), (0, k_pad - n_fft)))
    frames2d = frames2d.astype(jnp.bfloat16)                   # [m_pad, k_pad]
    # TODO(synk): for very long audio, frame inside the kernel (memory_space=pl.ANY
    # + per-tile DMA of the contiguous audio strip) to avoid materializing the
    # 2.5x-overlapped frame matrix in HBM.

    out2d = pl.pallas_call(
        functools.partial(_logmel_kernel, eps, nf_pad),
        out_shape=jax.ShapeDtypeStruct((m_pad, nm_pad), jnp.float32),
        grid=(m_pad // tm,),
        in_specs=[
            pl.BlockSpec((tm, k_pad), lambda i: (i, 0)),          # frame tile (pipelined)
            pl.BlockSpec((k_pad, 2 * nf_pad), lambda i: (0, 0)),  # fused DFT basis (resident)
            pl.BlockSpec((nf_pad, nm_pad), lambda i: (0, 0)),     # mel filterbank (resident)
        ],
        out_specs=pl.BlockSpec((tm, nm_pad), lambda i: (i, 0)),
        compiler_params=pltpu.CompilerParams(
            dimension_semantics=("parallel",)),
    )(frames2d, basis, mel_fb)

    logmel = out2d[:M, :n_mels].reshape(B, n_frames, n_mels)
    # Global mean subtraction (PyTorch `mel -= mel.mean()` over the whole tensor),
    # kept as a tiny XLA epilogue so the kernel stays tileable.
    return logmel - jnp.mean(logmel)


def _reference_logmel(audio, sr=DEFAULT_SR, n_mels=N_MELS, eps=EPS):
    """Pure-JAX f32 reference (gather framing, unpadded matmuls) for validation."""
    audio = audio.astype(jnp.float32)
    n_fft = int(25 / 1000 * sr)
    hop = int(10 / 1000 * sr)
    n_freqs = n_fft // 2 + 1
    pad = n_fft // 2
    basis_np, mel_np, _, nf_pad, _ = _padded_constants(sr, n_mels)
    cos_b = jnp.asarray(basis_np[:n_fft, :n_freqs])
    sin_b = jnp.asarray(basis_np[:n_fft, nf_pad:nf_pad + n_freqs])
    mel_fb = jnp.asarray(mel_np[:n_freqs, :n_mels])
    padded = jnp.pad(audio, ((0, 0), (pad, pad)), mode="reflect")
    n_frames = 1 + (padded.shape[1] - n_fft) // hop
    idx = jnp.arange(n_frames)[:, None] * hop + jnp.arange(n_fft)[None, :]
    frames = padded[:, idx]                                    # [B, n_frames, n_fft]
    re = jnp.einsum("btn,nf->btf", frames, cos_b)
    im = jnp.einsum("btn,nf->btf", frames, sin_b)
    mel = jnp.einsum("btf,fm->btm", re * re + im * im, mel_fb)
    logmel = jnp.log(mel + eps)
    return logmel - jnp.mean(logmel)


if __name__ == "__main__":
    key = jax.random.PRNGKey(0)
    B, L = 2, 1600          # 0.1 s of 16 kHz audio -> 11 frames x 80 mels
    audio = jax.random.normal(key, (B, L), dtype=jnp.float32)

    fn = jax.jit(log_mel_spec)
    out = jax.block_until_ready(fn(audio))

    hop = int(10 / 1000 * DEFAULT_SR)
    n_frames = 1 + L // hop
    assert out.shape == (B, n_frames, N_MELS), out.shape
    assert out.dtype == jnp.float32
    assert bool(jnp.isfinite(out).all())
    # global mean subtraction -> mean should be ~0
    assert abs(float(jnp.mean(out))) < 1e-3

    # Loose check against a pure-JAX fp32 reference (bf16 MXU inputs => ~1% rel err in mel).
    ref = jax.block_until_ready(_reference_logmel(audio))
    mean_abs_diff = float(jnp.mean(jnp.abs(out - ref)))
    assert mean_abs_diff < 0.05, mean_abs_diff

    print("KERNEL_OK")
</pallas_src>

<mosaic_0001>
module attributes {stable_mosaic.version = 11 : i64} {
  func.func @_logmel_kernel(%arg0: i32, %arg1: memref<24x512xbf16, #tpu.memory_space<vmem>>, %arg2: memref<512x512xbf16, #tpu.memory_space<vmem>>, %arg3: memref<256x128xf32, #tpu.memory_space<vmem>>, %arg4: memref<24x128xf32, #tpu.memory_space<vmem>>) attributes {dimension_semantics = [#tpu.dimension_semantics<parallel>], iteration_bounds = array<i64: 1>, scalar_prefetch = 0 : i64, scratch_operands = 0 : i64, tpu.core_type = #tpu.core_type<tc>, window_params = [{transform_indices = @transform_0, window_bounds = array<i64: 24, 512>}, {pipeline_mode = #tpu.pipeline_mode<synchronous>, transform_indices = @transform_1, window_bounds = array<i64: 512, 512>}, {pipeline_mode = #tpu.pipeline_mode<synchronous>, transform_indices = @transform_2, window_bounds = array<i64: 256, 128>}, {transform_indices = @transform_3, window_bounds = array<i64: 24, 128>}]} {
    %c0 = arith.constant 0 : index
    %c0_0 = arith.constant 0 : index
    %0 = vector.load %arg1[%c0, %c0_0] : memref<24x512xbf16, #tpu.memory_space<vmem>>, vector<24x512xbf16>
    %c0_1 = arith.constant 0 : index
    %c0_2 = arith.constant 0 : index
    %1 = vector.load %arg2[%c0_1, %c0_2] : memref<512x512xbf16, #tpu.memory_space<vmem>>, vector<512x512xbf16>
    %cst = arith.constant dense<0.000000e+00> : vector<24x512xf32>
    %2 = tpu.matmul %0, %1, %cst {dimension_numbers = #tpu.dot_dimension_numbers<[1], [0], [0], [1], [0, 0, 1, 1], [], []>} : vector<24x512xbf16>, vector<512x512xbf16>, vector<24x512xf32> -> vector<24x512xf32>
    %3 = vector.extract_strided_slice %2 {offsets = [0, 0], sizes = [24, 256], strides = [1, 1]} : vector<24x512xf32> to vector<24x256xf32>
    %4 = vector.extract_strided_slice %2 {offsets = [0, 256], sizes = [24, 256], strides = [1, 1]} : vector<24x512xf32> to vector<24x256xf32>
    %5 = arith.mulf %3, %3 : vector<24x256xf32>
    %6 = arith.mulf %4, %4 : vector<24x256xf32>
    %7 = arith.addf %5, %6 : vector<24x256xf32>
    %c0_3 = arith.constant 0 : index
    %c0_4 = arith.constant 0 : index
    %8 = vector.load %arg3[%c0_3, %c0_4] : memref<256x128xf32, #tpu.memory_space<vmem>>, vector<256x128xf32>
    %cst_5 = arith.constant dense<0.000000e+00> : vector<24x128xf32>
    %9 = tpu.matmul %7, %8, %cst_5 {dimension_numbers = #tpu.dot_dimension_numbers<[1], [0], [0], [1], [0, 0, 1, 1], [], []>} : vector<24x256xf32>, vector<256x128xf32>, vector<24x128xf32> -> vector<24x128xf32>
    %cst_6 = arith.constant 9.99999997E-7 : f32
    %10 = vector.broadcast %cst_6 : f32 to vector<24x128xf32>
    %11 = arith.addf %9, %10 : vector<24x128xf32>
    %12 = math.log %11 : vector<24x128xf32>
    %c0_7 = arith.constant 0 : index
    %c0_8 = arith.constant 0 : index
    %13 = vector.load %arg4[%c0_7, %c0_8] : memref<24x128xf32, #tpu.memory_space<vmem>>, vector<24x128xf32>
    tpu.vector_store %arg4[%c0_7, %c0_8], %12 {strides = array<i32>} : memref<24x128xf32, #tpu.memory_space<vmem>>, vector<24x128xf32>,
    return
  }
  func.func @transform_0(%arg0: i32) -> (i32, i32) {
    %c0_i32 = arith.constant 0 : i32
    %c0_i32_0 = arith.constant 0 : i32
    return %arg0, %c0_i32 : i32, i32
  }
  func.func @transform_1(%arg0: i32) -> (i32, i32) {
    %c0_i32 = arith.constant 0 : i32
    %c0_i32_0 = arith.constant 0 : i32
    %c0_i32_1 = arith.constant 0 : i32
    return %c0_i32, %c0_i32_0 : i32, i32
  }
  func.func @transform_2(%arg0: i32) -> (i32, i32) {
    %c0_i32 = arith.constant 0 : i32
    %c0_i32_0 = arith.constant 0 : i32
    %c0_i32_1 = arith.constant 0 : i32
    return %c0_i32, %c0_i32_0 : i32, i32
  }
  func.func @transform_3(%arg0: i32) -> (i32, i32) {
    %c0_i32 = arith.constant 0 : i32
    %c0_i32_0 = arith.constant 0 : i32
    return %arg0, %c0_i32 : i32, i32
  }
}

</mosaic_0001>

<llo_original>
// kernel: reverse.1
$region0: #{reverse.1}
  %s0 = inlined_call_operand.vmem [shape: bf16[2,256], index: 0, kind: input, shape index: {}]
  %s1 = inlined_call_operand.vmem [shape: bf16[2,256], index: 1, kind: output, shape index: {}]
  %v2 = vlaneseq
  %v3 = vsub.s32 127, %v2
  %4 = vset.pattern.permute.xlu0 %v3
  $region1: #{reverse.1} parent=0
    #allocation0 [shape = 'u8[4096]{0}', space=vmem, size = 0x1000, scoped, tag = 'operand span for operand 0']
    #allocation1 [shape = 'u8[1024]{0}', space=vmem, size = 0x400, scoped, tag = 'packed  for operand 0']
    #allocation2 [shape = 'u8[4096]{0}', space=vmem, size = 0x1000, scoped, tag = 'operand span for operand 1']
    #allocation3 [shape = 'u8[1024]{0}', space=vmem, size = 0x400, scoped, tag = 'packed  for operand 1']
    loop: start=0, step=1, limit=4
    $region2: #{reverse.1} parent=1 // loop_pre_header
      _
    $region3: #{reverse.1} parent=1 // loop_header
      %s6 = sphi 0, %s10
      %p7 = scmp.ge.s32.totalorder %s6, 4
      %s13 = sphi 0, %s25
      %s14 = sphi 0, %s21
      %s15 = sphi 0, %s13
      %s16 = sphi 0, %s14
      %s17 = sphi 0, %s15
      %s18 = sphi 0, %s16
    $region4: #{reverse.1} parent=1 // loop_header_branch
      %9 = sbr.rel (%p7) target = $region8
    $region5: #{reverse.1} parent=1 // loop_body
      %s11 = ssub.s32 %s6, 1
      %s12 = ssub.s32 %s6, 2
      %s19 = sadd.s32 1, %s14
      %p20 = scmp.ge.s32.totalorder %s19, 2
      %s21 = scalar_select %p20, 0, %s19
      %s22 = sadd.s32 1, %s13
      %s23 = scalar_select %p20, %s22, %s13
      %p24 = scmp.ge.s32.totalorder %s23, 1
      %s25 = scalar_select %p24, 0, %s23
      %p26 = scmp.le.s32.totalorder 1, %s6
      %p27 = scmp.lt.s32.totalorder %s6, 3
      %p28 = pnand %p26, %p27
      %p29 = pneg %p28
      // Predicated region
      $region9: #{reverse.1} parent=5 // pred_check
        _
      $region10: #{reverse.1} parent=5 // pred_check_branch
        %31 = sbr.rel (%p28) target = $region12
      $region11: #{reverse.1} parent=5 // pred_region
        %s32 = ssub.s32 %s6, 1
      $region12: #{reverse.1} parent=5 // pred_fallthru
        _
      %p33 = scmp.lt.s32.totalorder %s6, 2
      // Predicated region
      $region13: #{reverse.1} parent=5 // pred_check
        %p34 = pneg %p33
      $region14: #{reverse.1} parent=5 // pred_check_branch
        %36 = sbr.rel (%p34) target = $region16
      $region15: #{reverse.1} parent=5 // pred_region
        %s37 = sand.u32 %s6, 1
        %s38 = sand.u32 %s6, 1
        %s39 = scalar_lea.vmem [#allocation1], %s38
        %s40 = ssub.s32 1, %s14
        %s41 = smul.addr %s13, 2
        %s42 = sadd.s32 %s40, %s41
        %s43 = scalar_lea.vmem %s0, %s42
        // Predicated region
        $region17: #{reverse.1} parent=15 // pred_check
          _
        $region18: #{reverse.1} parent=15 // pred_check_branch
          %45 = sbr.rel (0) target = $region20
        $region19: #{reverse.1} parent=15 // pred_region
          // Predicated region
          $region21: #{reverse.1} parent=19 // pred_check
            _
          $region22: #{reverse.1} parent=19 // pred_check_branch
            %47 = sbr.rel target = $region24
          $region23: #{reverse.1} parent=19 // pred_region
            // Predicated region
            $region36: #{reverse.1} parent=23 // pred_check
              _
            $region37: #{reverse.1} parent=23 // pred_check_branch
              %62 = sbr.rel (0) target = $region39
            $region38: #{reverse.1} parent=23 // pred_region
              loop: start=0, step=1, limit=1
              $region40: #{reverse.1} parent=38 // loop_pre_header
                _
              $region41: #{reverse.1} parent=38 // loop_header
                %s65 = sphi 0, %s69
                %p66 = scmp.ge.s32.totalorder %s65, 1
                %s70 = sphi %s43, %s43
                %s71 = sphi %s39, %s39
              $region42: #{reverse.1} parent=38 // loop_header_branch
                %68 = sbr.rel (%p66) target = $region46
              $region43: #{reverse.1} parent=38 // loop_body
                %v72 = vld [vmem:[%s70] sm:$0x1]
                %73 = vst [vmem:[%s71] sm:$0x1] %v72
              $region44: #{reverse.1} parent=38 // loop_footer
                %s69 = sadd.s32 1, %s65
              $region45: #{reverse.1} parent=38 // loop_footer_branch
                %64 = sbr.rel target = $region41
              $region46: #{reverse.1} parent=38 // loop_exit
                _
            $region39: #{reverse.1} parent=23 // pred_fallthru
              _
          $region24: #{reverse.1} parent=19 // pred_fallthru
            _
          // Predicated region
          $region25: #{reverse.1} parent=19 // pred_check
            _
          $region26: #{reverse.1} parent=19 // pred_check_branch
            %49 = sbr.rel (0) target = $region28
          $region27: #{reverse.1} parent=19 // pred_region
            loop: start=0, step=1, limit=1
            $region29: #{reverse.1} parent=27 // loop_pre_header
              _
            $region30: #{reverse.1} parent=27 // loop_header
              %s52 = sphi 0, %s56
              %p53 = scmp.ge.s32.totalorder %s52, 1
              %s57 = sphi %s43, %s43
              %s58 = sphi %s39, %s39
            $region31: #{reverse.1} parent=27 // loop_header_branch
              %55 = sbr.rel (%p53) target = $region35
            $region32: #{reverse.1} parent=27 // loop_body
              %v59 = vld [vmem:[%s57] sm:$0x1]
              %60 = vst [vmem:[%s58] sm:$0x1] %v59
            $region33: #{reverse.1} parent=27 // loop_footer
              %s56 = sadd.s32 1, %s52
            $region34: #{reverse.1} parent=27 // loop_footer_branch
              %51 = sbr.rel target = $region30
            $region35: #{reverse.1} parent=27 // loop_exit
              _
          $region28: #{reverse.1} parent=19 // pred_fallthru
            _
        $region20: #{reverse.1} parent=15 // pred_fallthru
          _
        %74 = vnop
      $region16: #{reverse.1} parent=5 // pred_fallthru
        _
      %p75 = scmp.le.s32.totalorder 1, %s6
      %p76 = scmp.lt.s32.totalorder %s6, 3
      %p77 = pnand %p75, %p76
      %p78 = pneg %p77
      // Predicated region
      $region47: #{reverse.1} parent=5 // pred_check
        _
      $region48: #{reverse.1} parent=5 // pred_check_branch
        %80 = sbr.rel (%p77) target = $region50
      $region49: #{reverse.1} parent=5 // pred_region
        %s81 = ssub.s32 %s6, 1
        %s82 = sand.u32 %s11, 1
        %s83 = sand.u32 %s11, 1
        %s84 = scalar_lea.vmem [#allocation1], %s83
        %s85 = sand.u32 %s11, 1
        %s86 = sand.u32 %s11, 1
        %s87 = scalar_lea.vmem [#allocation1], %s86
        %s88 = sand.u32 %s11, 1
        %s89 = sand.u32 %s11, 1
        %s90 = scalar_lea.vmem [#allocation3], %s89
        %s92 = smul.u32 1, 2
        %s93 = sshllo.u32 0, %s92
        %s94 = sshrl.u32 %s93, 1
        %s95 = sor.u32 %s93, %s94
        %s96 = sand.u32 %s95, 85
        %s97 = sshrl.u32 %s96, 1
        %s98 = sor.u32 %s96, %s97
        %s99 = sand.u32 51, %s98
        %s100 = sshrl.u32 %s99, 2
        %s101 = sor.u32 %s99, %s100
        %s102 = sand.u32 15, %s101
        %v103 = vld [vmem:[%s87] sm:%s102]
        %v104 = vunpack.c.l.bf16 %v103
        %v105 = vunpack.c.h.bf16 %v103
        %106 = vst [vmem:[#allocation0] sm:%s93] %v104
        %s107 = ssub.s32 1, %s16
        %v108 = vld [vmem:[#allocation0] sm:$0xff]
        %109 = vperm.xlu0 %4, %v108
        %v110 = vpop.permute.xlu0 %109
        %111 = vst [vmem:[#allocation2] sm:$0xff] %v110
        %s113 = smul.u32 1, 2
        %s114 = sshllo.u32 0, %s113
        %s115 = sshrl.u32 %s113, 1
        %v116 = vld [vmem:[#allocation2] sm:%s114]
        %v117 = vpack.c.bf16 0.0, %v116
        %s118 = sshllo.u32 0, %s115
        %119 = vst [vmem:[%s90] sm:%s118] %v117
        %s120 = sand.u32 %s11, 1
        %s121 = sand.u32 %s11, 1
        %s122 = scalar_lea.vmem [#allocation3], %s121
        %s123 = smul.addr %s15, 2
        %s124 = sadd.s32 %s16, %s123
        %s125 = scalar_lea.vmem %s1, %s124
        // Predicated region
        $region51: #{reverse.1} parent=49 // pred_check
          _
        $region52: #{reverse.1} parent=49 // pred_check_branch
          %127 = sbr.rel (0) target = $region54
        $region53: #{reverse.1} parent=49 // pred_region
          // Predicated region
          $region55: #{reverse.1} parent=53 // pred_check
            _
          $region56: #{reverse.1} parent=53 // pred_check_branch
            %129 = sbr.rel target = $region58
          $region57: #{reverse.1} parent=53 // pred_region
            // Predicated region
            $region70: #{reverse.1} parent=57 // pred_check
              _
            $region71: #{reverse.1} parent=57 // pred_check_branch
              %144 = sbr.rel (0) target = $region73
            $region72: #{reverse.1} parent=57 // pred_region
              loop: start=0, step=1, limit=1
              $region74: #{reverse.1} parent=72 // loop_pre_header
                _
              $region75: #{reverse.1} parent=72 // loop_header
                %s147 = sphi 0, %s151
                %p148 = scmp.ge.s32.totalorder %s147, 1
                %s152 = sphi %s122, %s122
                %s153 = sphi %s125, %s125
              $region76: #{reverse.1} parent=72 // loop_header_branch
                %150 = sbr.rel (%p148) target = $region80
              $region77: #{reverse.1} parent=72 // loop_body
                %v154 = vld [vmem:[%s152] sm:$0x1]
                %155 = vst [vmem:[%s153] sm:$0x1] %v154
              $region78: #{reverse.1} parent=72 // loop_footer
                %s151 = sadd.s32 1, %s147
              $region79: #{reverse.1} parent=72 // loop_footer_branch
                %146 = sbr.rel target = $region75
              $region80: #{reverse.1} parent=72 // loop_exit
                _
            $region73: #{reverse.1} parent=57 // pred_fallthru
              _
          $region58: #{reverse.1} parent=53 // pred_fallthru
            _
          // Predicated region
          $region59: #{reverse.1} parent=53 // pred_check
            _
          $region60: #{reverse.1} parent=53 // pred_check_branch
            %131 = sbr.rel (0) target = $region62
          $region61: #{reverse.1} parent=53 // pred_region
            loop: start=0, step=1, limit=1
            $region63: #{reverse.1} parent=61 // loop_pre_header
              _
            $region64: #{reverse.1} parent=61 // loop_header
              %s134 = sphi 0, %s138
              %p135 = scmp.ge.s32.totalorder %s134, 1
              %s139 = sphi %s122, %s122
              %s140 = sphi %s125, %s125
            $region65: #{reverse.1} parent=61 // loop_header_branch
              %137 = sbr.rel (%p135) target = $region69
            $region66: #{reverse.1} parent=61 // loop_body
              %v141 = vld [vmem:[%s139] sm:$0x1]
              %142 = vst [vmem:[%s140] sm:$0x1] %v141
            $region67: #{reverse.1} parent=61 // loop_footer
              %s138 = sadd.s32 1, %s134
            $region68: #{reverse.1} parent=61 // loop_footer_branch
              %133 = sbr.rel target = $region64
            $region69: #{reverse.1} parent=61 // loop_exit
              _
          $region62: #{reverse.1} parent=53 // pred_fallthru
            _
        $region54: #{reverse.1} parent=49 // pred_fallthru
          _
        %156 = vnop
      $region50: #{reverse.1} parent=5 // pred_fallthru
        _
      %p157 = scmp.le.s32.totalorder 2, %s6
      // Predicated region
      $region81: #{reverse.1} parent=5 // pred_check
        %p158 = pneg %p157
      $region82: #{reverse.1} parent=5 // pred_check_branch
        %160 = sbr.rel (%p158) target = $region84
      $region83: #{reverse.1} parent=5 // pred_region
        %s161 = ssub.s32 %s6, 2
        %s162 = sand.u32 %s12, 1
        %s163 = sand.u32 %s12, 1
        %s164 = scalar_lea.vmem [#allocation3], %s163
      $region84: #{reverse.1} parent=5 // pred_fallthru
        _
    $region6: #{reverse.1} parent=1 // loop_footer
      %s10 = sadd.s32 1, %s6
    $region7: #{reverse.1} parent=1 // loop_footer_branch
      %5 = sbr.rel target = $region3
    $region8: #{reverse.1} parent=1 // loop_exit
      _

</llo_original>
